<compile_context>
chip_gen: v7x
topology: tpu7x:2x2x1
jax: 0.10.0
libtpu: 0.0.40
codegen_flags: <defaults>
</compile_context>

<pallas_src>
import jax
import jax.numpy as jnp
from jax.experimental import pallas as pl
from jax.experimental.pallas import tpu as pltpu

_MiB = 1024 * 1024


def _vmem_capacity_bytes():
    """Physical VMEM per TensorCore; conservative (v7x-sized) fallback."""
    try:
        return int(pltpu.get_tpu_info().vmem_capacity_bytes)
    except Exception:
        return 64 * _MiB  # safe lower bound for every generation


def _pick_seq_tile(S, H, itemsize, num_hidden, budget):
    """Largest seq tile whose double-buffered hidden blocks fit `budget` and
    that divides S. Prefers 128-multiples, then 8-multiples, else TS = S."""
    max_rows = max(8, budget // (H * itemsize * num_hidden * 2))
    if S <= max_rows:
        return S
    for align in (128, 8):
        t = (max_rows // align) * align
        while t >= align:
            if S % t == 0:
                return t
            t -= align
    # TODO(synk): S not divisible by any 8-aligned tile <= budget; fall back
    # to one block per row (vmem_limit_bytes is raised to cover it when possible).
    return S


def _make_pool_kernel(num_hidden, seq_tile, n_seq_per_split, precision):
    """Masked partial-sum pooling kernel.

    Refs:
      mask (1, n_s, TS)  -- full per-b mask, resident across the seq axis
      h_i  (1, TS, H)    -- hidden tile(s), native dtype
      out  (1, 1, 1, H)  -- f32 partial numerator for (split p, batch b)
    Grid = (n_split, B, n_seq_per_split); seq axis last, "arbitrary".
    """
    assert num_hidden in (1, 2)
    scale = 1.0 / float(num_hidden)

    def kernel(mask_ref, *refs):
        h_refs = refs[:num_hidden]
        out_ref = refs[num_hidden]

        p = pl.program_id(0)
        s = pl.program_id(2)

        @pl.when(s == 0)
        def _init():
            out_ref[...] = jnp.zeros_like(out_ref)

        # This step's (1, TS) mask row from the resident mask block
        # (sublane-dynamic slice; no per-step mask DMA).
        tile_idx = p * n_seq_per_split + s
        m = mask_ref[:, pl.ds(tile_idx, 1), :]          # (1, 1, TS)
        m_row = m.reshape(1, seq_tile)                  # (1, TS), lane-dense

        # Masked sum over the sequence as MXU matvec(s), f32 accumulation.
        # num_hidden == 2: two separate f32-accumulated dots (no native-dtype
        # add of the two layers before the matmul).
        acc = None
        for h_ref in h_refs:
            h = h_ref[...]                              # (1, TS, H)
            h2d = h.reshape(h.shape[1], h.shape[2])     # (TS, H)
            d = jnp.dot(m_row, h2d, precision=precision,
                        preferred_element_type=jnp.float32)   # (1, H) f32
            acc = d if acc is None else acc + d
        if scale != 1.0:
            acc = acc * scale                           # fold the /2 into f32
        out_ref[...] += acc.reshape(1, 1, 1, -1)

    return kernel


def _masked_avg_pool(attention_mask, hidden_list):
    """pooled[b] = sum_s mask[b,s] * mean_i(hidden_i[b,s]) / sum_s mask[b,s]"""
    num_hidden = len(hidden_list)
    h0 = hidden_list[0]
    B, S, H = h0.shape
    dtype = h0.dtype
    itemsize = jnp.dtype(dtype).itemsize

    # Per-generation budgeting: 3/8 of physical VMEM for the double-buffered
    # hidden blocks (48 MiB on 128-MiB chips, 24 MiB on 64-MiB v7x).
    vmem_cap = _vmem_capacity_bytes()
    budget = (vmem_cap * 3) // 8

    TS = _pick_seq_tile(S, H, itemsize, num_hidden, budget)
    n_s = S // TS

    # For B == 1, split the seq tiles across a leading "parallel" axis so both
    # v7x TensorCores stream HBM; partials are combined in the wrapper.
    n_split = 2 if (B == 1 and n_s >= 2 and n_s % 2 == 0) else 1
    n_sp = n_s // n_split

    # HIGHEST precision only for f32 inputs (bf16 w/ f32 accumulation is exact).
    precision = jax.lax.Precision.HIGHEST if dtype == jnp.float32 else None

    # Only the tiny mask is cast/reshaped; hidden states stay untouched in HBM.
    mask3 = attention_mask.reshape(B, n_s, TS).astype(dtype)

    # Deeper buffering when the hidden blocks are small.
    block_bytes = TS * H * itemsize
    buffers = 3 if (n_sp >= 3 and num_hidden * 3 * block_bytes <= budget) else 2

    def _hidden_index(p, b, s):
        return (b, p * n_sp + s, 0)

    if buffers > 2:
        try:
            hidden_spec = pl.BlockSpec((1, TS, H), _hidden_index,
                                       pipeline_mode=pl.Buffered(buffers))
        except TypeError:  # pipeline_mode not supported in this jax version
            hidden_spec = pl.BlockSpec((1, TS, H), _hidden_index)
            buffers = 2
    else:
        hidden_spec = pl.BlockSpec((1, TS, H), _hidden_index)

    hidden_bytes = num_hidden * buffers * block_bytes
    vmem_limit = int(min(vmem_cap - 8 * _MiB,
                         max(budget + 16 * _MiB, hidden_bytes + 16 * _MiB)))

    kernel = _make_pool_kernel(num_hidden, TS, n_sp, precision)

    partial = pl.pallas_call(
        kernel,
        out_shape=jax.ShapeDtypeStruct((n_split, B, 1, H), jnp.float32),
        grid_spec=pltpu.PrefetchScalarGridSpec(
            num_scalar_prefetch=0,
            grid=(n_split, B, n_sp),
            in_specs=[pl.BlockSpec((1, n_s, TS), lambda p, b, s: (b, 0, 0))]
                     + [hidden_spec] * num_hidden,
            out_specs=pl.BlockSpec((1, 1, 1, H), lambda p, b, s: (p, b, 0, 0)),
        ),
        compiler_params=pltpu.CompilerParams(
            dimension_semantics=("parallel", "parallel", "arbitrary"),
            vmem_limit_bytes=vmem_limit),
    )(mask3, *hidden_list)

    num = partial.sum(axis=0).reshape(B, H)                         # f32
    den = attention_mask.astype(jnp.float32).sum(axis=-1)[:, None]  # (B, 1)
    # NOTE: all-zero mask rows produce inf/nan, same as the reference.
    return (num / den).astype(dtype)


class Pooler:
    """JAX/Pallas port of the PyTorch `Pooler` (parameter-free)."""

    def __init__(self, pooler_type):
        assert pooler_type in ["avg", "avg_top2", "avg_first_last"], (
            "unrecognized pooling type %s" % pooler_type)
        self.pooler_type = pooler_type

    def __call__(self, attention_mask, encoder_last_hidden_state, encoder_hidden_states):
        if self.pooler_type == "avg":
            # single-input fast path: the hidden state is DMA'd exactly once
            return _masked_avg_pool(attention_mask, [encoder_last_hidden_state])
        elif self.pooler_type == "avg_first_last":
            return _masked_avg_pool(
                attention_mask,
                [encoder_hidden_states[0], encoder_hidden_states[-1]])
        elif self.pooler_type == "avg_top2":
            return _masked_avg_pool(
                attention_mask,
                [encoder_hidden_states[-2], encoder_hidden_states[-1]])
        else:
            raise NotImplementedError


def _reference(pooler_type, attention_mask, last_hidden, hidden_states):
    mask = attention_mask.astype(jnp.float32)
    if pooler_type == "avg":
        h = last_hidden
    elif pooler_type == "avg_first_last":
        h = (hidden_states[0] + hidden_states[-1]) / 2.0
    else:  # avg_top2
        h = (hidden_states[-2] + hidden_states[-1]) / 2.0
    return (h * mask[:, :, None]).sum(1) / mask.sum(-1)[:, None]


if __name__ == "__main__":
    key = jax.random.PRNGKey(0)
    B, S, H = 2, 8, 32          # batch, seq, hidden
    n_layers = 4                # encoder_hidden_states: embeddings + layers

    k_mask, k_hid = jax.random.split(key)

    # attention mask: first row full length, second row has a padded tail
    lengths = jnp.array([S, S - 3], dtype=jnp.int32)
    attention_mask = (jnp.arange(S)[None, :] < lengths[:, None]).astype(jnp.float32)

    hidden_states = tuple(
        jax.random.normal(jax.random.fold_in(k_hid, i), (B, S, H), dtype=jnp.float32)
        for i in range(n_layers)
    )
    encoder_last_hidden_state = hidden_states[-1]

    ok = True
    for pooler_type in ["avg", "avg_first_last", "avg_top2"]:
        pooler = Pooler(pooler_type)
        out = pooler(attention_mask, encoder_last_hidden_state, hidden_states)
        out = jax.block_until_ready(out)
        ref = _reference(pooler_type, attention_mask, encoder_last_hidden_state,
                         hidden_states)
        if out.shape != (B, H) or not jnp.allclose(out, ref, atol=1e-5, rtol=1e-5):
            ok = False

    if ok:
        print("KERNEL_OK")
</pallas_src>

<mosaic_0001>
module attributes {stable_mosaic.version = 11 : i64} {
  func.func @kernel(%arg0: i32, %arg1: i32, %arg2: i32, %arg3: memref<1x1x8xf32, #tpu.memory_space<vmem>>, %arg4: memref<1x8x32xf32, #tpu.memory_space<vmem>>, %arg5: memref<1x1x1x32xf32, #tpu.memory_space<vmem>>) attributes {dimension_semantics = [#tpu.dimension_semantics<parallel>, #tpu.dimension_semantics<parallel>, #tpu.dimension_semantics<arbitrary>], iteration_bounds = array<i64: 1, 2, 1>, scalar_prefetch = 0 : i64, scratch_operands = 0 : i64, tpu.core_type = #tpu.core_type<tc>, window_params = [{transform_indices = @transform_0, window_bounds = array<i64: 1, 1, 8>}, {transform_indices = @transform_1, window_bounds = array<i64: 1, 8, 32>}, {transform_indices = @transform_2, window_bounds = array<i64: 1, 1, 1, 32>}]} {
    %c0_i32 = arith.constant 0 : i32
    %0 = arith.cmpi eq, %arg2, %c0_i32 : i32
    %1 = arith.extui %0 : i1 to i32
    %c0_i32_0 = arith.constant 0 : i32
    %2 = arith.cmpi ne, %1, %c0_i32_0 : i32
    scf.if %2 {
      %cst_13 = arith.constant 0.000000e+00 : f32
      %15 = vector.broadcast %cst_13 : f32 to vector<1x1x1x32xf32>
      %c0_14 = arith.constant 0 : index
      %c0_15 = arith.constant 0 : index
      %c0_16 = arith.constant 0 : index
      %c0_17 = arith.constant 0 : index
      %16 = vector.load %arg5[%c0_14, %c0_15, %c0_16, %c0_17] : memref<1x1x1x32xf32, #tpu.memory_space<vmem>>, vector<1x1x1x32xf32>
      tpu.vector_store %arg5[%c0_14, %c0_15, %c0_16, %c0_17], %15 {strides = array<i32>} : memref<1x1x1x32xf32, #tpu.memory_space<vmem>>, vector<1x1x1x32xf32>,
    } else {
    }
    %c1_i32 = arith.constant 1 : i32
    %3 = arith.muli %arg0, %c1_i32 : i32
    %4 = arith.addi %3, %arg2 : i32
    %c0 = arith.constant 0 : index
    %5 = arith.index_cast %4 : i32 to index
    %c0_1 = arith.constant 0 : index
    %6 = vector.load %arg3[%c0, %5, %c0_1] : memref<1x1x8xf32, #tpu.memory_space<vmem>>, vector<1x1x8xf32>
    %7 = vector.shape_cast %6 : vector<1x1x8xf32> to vector<1x8xf32>
    %c0_2 = arith.constant 0 : index
    %c0_3 = arith.constant 0 : index
    %c0_4 = arith.constant 0 : index
    %8 = vector.load %arg4[%c0_2, %c0_3, %c0_4] : memref<1x8x32xf32, #tpu.memory_space<vmem>>, vector<1x8x32xf32>
    %9 = vector.shape_cast %8 : vector<1x8x32xf32> to vector<8x32xf32>
    %cst = arith.constant dense<0.000000e+00> : vector<1x32xf32>
    %10 = tpu.matmul %7, %9, %cst {dimension_numbers = #tpu.dot_dimension_numbers<[1], [0], [0], [1], [0, 0, 1, 1], [], []>, precision = #tpu.contract_precision<fp32>} : vector<1x8xf32>, vector<8x32xf32>, vector<1x32xf32> -> vector<1x32xf32>
    %c0_5 = arith.constant 0 : index
    %c0_6 = arith.constant 0 : index
    %c0_7 = arith.constant 0 : index
    %c0_8 = arith.constant 0 : index
    %11 = vector.load %arg5[%c0_5, %c0_6, %c0_7, %c0_8] : memref<1x1x1x32xf32, #tpu.memory_space<vmem>>, vector<1x1x1x32xf32>
    %12 = vector.shape_cast %10 : vector<1x32xf32> to vector<1x1x1x32xf32>
    %13 = arith.addf %11, %12 : vector<1x1x1x32xf32>
    %c0_9 = arith.constant 0 : index
    %c0_10 = arith.constant 0 : index
    %c0_11 = arith.constant 0 : index
    %c0_12 = arith.constant 0 : index
    %14 = vector.load %arg5[%c0_9, %c0_10, %c0_11, %c0_12] : memref<1x1x1x32xf32, #tpu.memory_space<vmem>>, vector<1x1x1x32xf32>
    tpu.vector_store %arg5[%c0_9, %c0_10, %c0_11, %c0_12], %13 {strides = array<i32>} : memref<1x1x1x32xf32, #tpu.memory_space<vmem>>, vector<1x1x1x32xf32>,
    return
  }
  func.func @transform_0(%arg0: i32, %arg1: i32, %arg2: i32) -> (i32, i32, i32) {
    %c0_i32 = arith.constant 0 : i32
    %c0_i32_0 = arith.constant 0 : i32
    %c0_i32_1 = arith.constant 0 : i32
    return %arg1, %c0_i32, %c0_i32_0 : i32, i32, i32
  }
  func.func @transform_1(%arg0: i32, %arg1: i32, %arg2: i32) -> (i32, i32, i32) {
    %c1_i32 = arith.constant 1 : i32
    %0 = arith.muli %arg0, %c1_i32 : i32
    %1 = arith.addi %0, %arg2 : i32
    %c0_i32 = arith.constant 0 : i32
    %c0_i32_0 = arith.constant 0 : i32
    return %arg1, %1, %c0_i32 : i32, i32, i32
  }
  func.func @transform_2(%arg0: i32, %arg1: i32, %arg2: i32) -> (i32, i32, i32, i32) {
    %c0_i32 = arith.constant 0 : i32
    %c0_i32_0 = arith.constant 0 : i32
    %c0_i32_1 = arith.constant 0 : i32
    return %arg0, %arg1, %c0_i32, %c0_i32_0 : i32, i32, i32, i32
  }
}

</mosaic_0001>

<llo_original>
// kernel: tpu_custom_call.1
$region0: #{tpu_custom_call.1}
  #allocation0 [shape = 'u32[]', space=smem, size = 0x4, offset = 0x4, fixed_abs, tag = 'smem constant byte address 0x4 - core index']
  #allocation1 [shape = 'u32[144,128]{1,0:T(1,128)}', space=vmem, size = 0x12000, scoped, tag = 'internal scratch']
  %s0 = inlined_call_operand.hbm [shape: f32[2,1,8], index: 0, kind: input, shape index: {}]
  %s1 = inlined_call_operand.hbm [shape: f32[2,8,32], index: 1, kind: input, shape index: {}]
  %s2 = inlined_call_operand.hbm [shape: f32[1,2,1,32], index: 2, kind: output, shape index: {}]
  %s3 = sld [smem:[#allocation0]]
  $region53: #{tpu_custom_call.1} parent=0
    _
  %s5 = ssub.s32 1, %s3
  %s6 = scalar_select 0, %s5, %s3
  $region1: #{tpu_custom_call.1} parent=0
    #allocation2 [shape = 'u8[1024]{0}', space=vmem, size = 0x400, scoped, tag = 'input window, operand 0']
    #allocation3 [shape = 's32[2]{0}', space=sflag, size = 0x8, scoped, tag = 'scoped memory for tpu_custom_call.1']
    #allocation4 [shape = 's32[2]{0}', space=sflag, size = 0x8, scoped, tag = 'scoped memory for tpu_custom_call.1']
    #allocation5 [shape = 'u8[8192]{0}', space=vmem, size = 0x2000, scoped, tag = 'input window, operand 1']
    #allocation6 [shape = 's32[2]{0}', space=sflag, size = 0x8, scoped, tag = 'scoped memory for tpu_custom_call.1']
    #allocation7 [shape = 'u8[1024]{0}', space=vmem, size = 0x400, scoped, tag = 'output window, operand 0']
    %7 = vsyncpa [#allocation3], 0
    %s8 = scalar_lea.sflag [#allocation3], 1
    %9 = vsyncpa %s8, 0
    %10 = vsyncpa [#allocation6], 0
    %s11 = scalar_lea.sflag [#allocation6], 1
    %12 = vsyncpa %s11, 0
    %13 = vsyncpa [#allocation4], 0
    %s14 = scalar_lea.sflag [#allocation4], 1
    %15 = vsyncpa %s14, 0
    loop: start=0, step=1, limit=4
    $region2: #{tpu_custom_call.1} parent=1 // loop_pre_header
      _
    $region3: #{tpu_custom_call.1} parent=1 // loop_header
      %s17 = sphi 0, %s21
      %p18 = scmp.ge.s32.totalorder %s17, 4
      %s24 = sphi 0, %s43
      %s25 = sphi 0, %s39
      %s26 = sphi 0, %s35
      %s27 = sphi 0, %s24
      %s28 = sphi 0, %s25
      %s29 = sphi 0, %s26
      %s30 = sphi 0, %s27
      %s31 = sphi 0, %s28
      %s32 = sphi 0, %s29
      %s46 = sphi 0, %s48
      %s49 = sphi 0, %s46
      %s50 = sphi 0, %s49
      %s66 = sphi 0, %s50
      %s76 = sphi 0, %s78
      %s79 = sphi 0, %s76
      %s80 = sphi 0, %s79
      %s96 = sphi 0, %s80
      %s104 = sphi 0, %s106
      %s107 = sphi 0, %s104
      %s108 = sphi 0, %s107
      %s124 = sphi 0, %s108
    $region4: #{tpu_custom_call.1} parent=1 // loop_header_branch
      %20 = sbr.rel (%p18) target = $region8
    $region5: #{tpu_custom_call.1} parent=1 // loop_body
      %s22 = ssub.s32 %s17, 1
      %s23 = ssub.s32 %s17, 2
      %s33 = sadd.s32 1, %s26
      %p34 = scmp.ge.s32.totalorder %s33, 1
      %s35 = scalar_select %p34, 0, %s33
      %s36 = sadd.s32 1, %s25
      %s37 = scalar_select %p34, %s36, %s25
      %p38 = scmp.ge.s32.totalorder %s37, 2
      %s39 = scalar_select %p38, 0, %s37
      %s40 = sadd.s32 1, %s24
      %s41 = scalar_select %p38, %s40, %s24
      %p42 = scmp.ge.s32.totalorder %s41, 1
      %s43 = scalar_select %p42, 0, %s41
      %s44 = ssub.s32 %s25, %s39
      %p45 = scmp.eq.s32.totalorder %s44, 0
      %s47 = sadd.s32 %s46, 1
      %s48 = scalar_select %p45, %s46, %s47
      %p51 = pneg %p45
      %p52 = scmp.eq.s32.totalorder %s17, 1
      %p53 = por %p51, %p52
      %p54 = scmp.ne.s32.totalorder %s46, %s49
      %p55 = scmp.eq.s32.totalorder %s17, 0
      %p56 = por %p54, %p55
      %p57 = scmp.ne.s32.totalorder %s46, %s49
      %p58 = scmp.eq.s32.totalorder %s22, 1
      %p59 = por %p57, %p58
      %p60 = scmp.ne.s32.totalorder %s49, %s50
      %p61 = scmp.eq.s32.totalorder %s22, 0
      %p62 = por %p60, %p61
      %p63 = scmp.ne.s32.totalorder %s49, %s50
      %p64 = scmp.eq.s32.totalorder %s23, 1
      %p65 = por %p63, %p64
      %p67 = scmp.ne.s32.totalorder %s50, %s66
      %p68 = scmp.eq.s32.totalorder %s23, 0
      %p69 = por %p67, %p68
      %s70 = sadd.s32 %s24, %s26
      %s71 = sadd.s32 %s43, %s35
      %s72 = ssub.s32 %s25, %s39
      %s73 = ssub.s32 %s70, %s71
      %s74 = sor.u32 %s72, %s73
      %p75 = scmp.eq.s32.totalorder %s74, 0
      %s77 = sadd.s32 %s76, 1
      %s78 = scalar_select %p75, %s76, %s77
      %p81 = pneg %p75
      %p82 = scmp.eq.s32.totalorder %s17, 1
      %p83 = por %p81, %p82
      %p84 = scmp.ne.s32.totalorder %s76, %s79
      %p85 = scmp.eq.s32.totalorder %s17, 0
      %p86 = por %p84, %p85
      %p87 = scmp.ne.s32.totalorder %s76, %s79
      %p88 = scmp.eq.s32.totalorder %s22, 1
      %p89 = por %p87, %p88
      %p90 = scmp.ne.s32.totalorder %s79, %s80
      %p91 = scmp.eq.s32.totalorder %s22, 0
      %p92 = por %p90, %p91
      %p93 = scmp.ne.s32.totalorder %s79, %s80
      %p94 = scmp.eq.s32.totalorder %s23, 1
      %p95 = por %p93, %p94
      %p97 = scmp.ne.s32.totalorder %s80, %s96
      %p98 = scmp.eq.s32.totalorder %s23, 0
      %p99 = por %p97, %p98
      %s100 = ssub.s32 %s24, %s43
      %s101 = ssub.s32 %s25, %s39
      %s102 = sor.u32 %s100, %s101
      %p103 = scmp.eq.s32.totalorder %s102, 0
      %s105 = sadd.s32 %s104, 1
      %s106 = scalar_select %p103, %s104, %s105
      %p109 = pneg %p103
      %p110 = scmp.eq.s32.totalorder %s17, 1
      %p111 = por %p109, %p110
      %p112 = scmp.ne.s32.totalorder %s104, %s107
      %p113 = scmp.eq.s32.totalorder %s17, 0
      %p114 = por %p112, %p113
      %p115 = scmp.ne.s32.totalorder %s104, %s107
      %p116 = scmp.eq.s32.totalorder %s22, 1
      %p117 = por %p115, %p116
      %p118 = scmp.ne.s32.totalorder %s107, %s108
      %p119 = scmp.eq.s32.totalorder %s22, 0
      %p120 = por %p118, %p119
      %p121 = scmp.ne.s32.totalorder %s107, %s108
      %p122 = scmp.eq.s32.totalorder %s23, 1
      %p123 = por %p121, %p122
      %p125 = scmp.ne.s32.totalorder %s108, %s124
      %p126 = scmp.eq.s32.totalorder %s23, 0
      %p127 = por %p125, %p126
      %p128 = scmp.le.s32.totalorder 1, %s17
      %p129 = scmp.lt.s32.totalorder %s17, 3
      %p130 = pnand %p128, %p129
      %p131 = pneg %p130
      // Predicated region
      $region9: #{tpu_custom_call.1} parent=5 // pred_check
        _
      $region10: #{tpu_custom_call.1} parent=5 // pred_check_branch
        %133 = sbr.rel (%p130) target = $region12
      $region11: #{tpu_custom_call.1} parent=5 // pred_region
        %s134 = ssub.s32 %s17, 1
      $region12: #{tpu_custom_call.1} parent=5 // pred_fallthru
        _
      %p135 = scmp.lt.s32.totalorder %s17, 2
      // Predicated region
      $region13: #{tpu_custom_call.1} parent=5 // pred_check
        %p136 = pneg %p135
      $region14: #{tpu_custom_call.1} parent=5 // pred_check_branch
        %138 = sbr.rel (%p136) target = $region16
      $region15: #{tpu_custom_call.1} parent=5 // pred_region
        // Predicated region
        $region17: #{tpu_custom_call.1} parent=15 // pred_check
          %p139 = pneg %p56
        $region18: #{tpu_custom_call.1} parent=15 // pred_check_branch
          %141 = sbr.rel (%p139) target = $region20
        $region19: #{tpu_custom_call.1} parent=15 // pred_region
          %s142 = sand.u32 %s46, 1
          %s143 = scalar_lea.sflag [#allocation3], %s142
          %s144 = sand.u32 %s46, 1
          %s145 = scalar_lea.vmem [#allocation2], %s144
          %s147 = ssub.s32 16, 16
          %148 = vsyncadd %s143, %s147
          %s149 = smul.addr %s25, 16
          %s150 = scalar_lea.hbm %s0, %s149
          %s152 = sshll.u32 %s145, 4
          %s153 = int_to_ptr.vmem [resolvable:$true] %s152
          %155 = dma.hbm_to_vmem [thread:$0]  %s150, 16, %s153, %s143
        $region20: #{tpu_custom_call.1} parent=15 // pred_fallthru
          _
        // Predicated region
        $region21: #{tpu_custom_call.1} parent=15 // pred_check
          %p156 = pneg %p86
        $region22: #{tpu_custom_call.1} parent=15 // pred_check_branch
          %158 = sbr.rel (%p156) target = $region24
        $region23: #{tpu_custom_call.1} parent=15 // pred_region
          %s159 = sand.u32 %s76, 1
          %s160 = scalar_lea.sflag [#allocation6], %s159
          %s161 = sand.u32 %s76, 1
          %s162 = smul.addr %s161, 8
          %s163 = scalar_lea.vmem [#allocation5], %s162
          %s164 = sadd.s32 %s24, %s26
          %s166 = ssub.s32 128, 128
          %167 = vsyncadd %s160, %s166
          %s168 = sadd.s32 %s164, %s25
          %s169 = smul.addr %s168, 128
          %s170 = scalar_lea.hbm %s1, %s169
          %s172 = sshll.u32 %s163, 4
          %s173 = int_to_ptr.vmem [resolvable:$true] %s172
          %175 = dma.hbm_to_vmem [thread:$0]  %s170, 128, %s173, %s160
        $region24: #{tpu_custom_call.1} parent=15 // pred_fallthru
          _
      $region16: #{tpu_custom_call.1} parent=5 // pred_fallthru
        _
      %p176 = scmp.le.s32.totalorder 1, %s17
      %p177 = scmp.lt.s32.totalorder %s17, 3
      %p178 = pnand %p176, %p177
      %p179 = pneg %p178
      // Predicated region
      $region25: #{tpu_custom_call.1} parent=5 // pred_check
        _
      $region26: #{tpu_custom_call.1} parent=5 // pred_check_branch
        %181 = sbr.rel (%p178) target = $region28
      $region27: #{tpu_custom_call.1} parent=5 // pred_region
        %s182 = ssub.s32 %s17, 1
        %s183 = sand.u32 %s49, 1
        %s184 = scalar_lea.sflag [#allocation3], %s183
        %s185 = sand.u32 %s49, 1
        %s186 = scalar_lea.vmem [#allocation2], %s185
        // Predicated region
        $region29: #{tpu_custom_call.1} parent=27 // pred_check
          %p187 = pneg %p62
        $region30: #{tpu_custom_call.1} parent=27 // pred_check_branch
          %189 = sbr.rel (%p187) target = $region32
        $region31: #{tpu_custom_call.1} parent=27 // pred_region
          %190 = dma.done %s184, 16
        $region32: #{tpu_custom_call.1} parent=27 // pred_fallthru
          _
        %s191 = sand.u32 %s79, 1
        %s192 = scalar_lea.sflag [#allocation6], %s191
        %s193 = sand.u32 %s79, 1
        %s194 = smul.addr %s193, 8
        %s195 = scalar_lea.vmem [#allocation5], %s194
        // Predicated region
        $region33: #{tpu_custom_call.1} parent=27 // pred_check
          %p196 = pneg %p92
        $region34: #{tpu_custom_call.1} parent=27 // pred_check_branch
          %198 = sbr.rel (%p196) target = $region36
        $region35: #{tpu_custom_call.1} parent=27 // pred_region
          %199 = dma.done %s192, 128
        $region36: #{tpu_custom_call.1} parent=27 // pred_fallthru
          _
        %s200 = sand.u32 %s49, 1
        %s201 = scalar_lea.sflag [#allocation3], %s200
        %s202 = sand.u32 %s49, 1
        %s203 = scalar_lea.vmem [#allocation2], %s202
        %p204 = pneg %p62
        %p205 = pneg %p59
        %s206 = sand.u32 %s79, 1
        %s207 = scalar_lea.sflag [#allocation6], %s206
        %s208 = sand.u32 %s79, 1
        %s209 = smul.addr %s208, 8
        %s210 = scalar_lea.vmem [#allocation5], %s209
        %p211 = pneg %p92
        %p212 = pneg %p89
        %p213 = pneg %p120
        %p214 = pneg %p117
        %s215 = sand.u32 %s107, 1
        %s216 = scalar_lea.sflag [#allocation4], %s215
        %s217 = sand.u32 %s107, 1
        %s218 = scalar_lea.vmem [#allocation7], %s217
        %s219 = sadd.s32 %s27, %s29
        %p220 = scmp.eq.s32.totalorder %s29, 0
        // Predicated region
        $region37: #{tpu_custom_call.1} parent=27 // pred_check
          %p221 = pneg %p220
        $region38: #{tpu_custom_call.1} parent=27 // pred_check_branch
          %223 = sbr.rel (%p221) target = $region40
        $region39: #{tpu_custom_call.1} parent=27 // pred_region
          %vm224 = vcmask 253952
          %225 = vst.msk [vmem:[%s218] sm:$0x1] %vm224, 0.0
        $region40: #{tpu_custom_call.1} parent=27 // pred_fallthru
          _
        %s226 = sadd.s32 %s27, %s29
        %s227 = scalar_lea.vmem %s186, %s226 [#allocation2]
        %v228 = vld [vmem:[%s227] sm:$0x1]
        %v229 = vld [vmem:[%s195] sm:$0xff]
        %vm230 = vcmask 64512
        %v232 = vsel %vm230, %v228, 0
        %234 = vmatprep.subr.mxu0 0.0
        %v235 = vand.u32 %v229, 4294901760
        %236 = vmatpush1.msra.mxu0 %v235
        %237 = vmatprep.subr.mxu0 0.0
        %238 = vmatpush1.msra.mxu0 0.0
        %239 = vmatprep.subr.mxu0 0.0
        %240 = vmatpush1.msra.mxu0 0.0
        %241 = vmatprep.subr.mxu0 0.0
        %242 = vmatpush1.msra.mxu0 0.0
        %243 = vmatprep.subr.mxu0 0.0
        %244 = vmatpush1.msra.mxu0 0.0
        %245 = vmatprep.subr.mxu0 0.0
        %246 = vmatpush1.msra.mxu0 0.0
        %247 = vmatprep.subr.mxu0 0.0
        %248 = vmatpush1.msra.mxu0 0.0
        %249 = vmatprep.subr.mxu0 0.0
        %250 = vmatpush1.msra.mxu0 0.0
        %251 = vmatprep.subr.mxu0 0.0
        %252 = vmatpush1.msra.mxu0 0.0
        %253 = vmatprep.subr.mxu0 0.0
        %254 = vmatpush1.msra.mxu0 0.0
        %255 = vmatprep.subr.mxu0 0.0
        %256 = vmatpush1.msra.mxu0 0.0
        %257 = vmatprep.subr.mxu0 0.0
        %258 = vmatpush1.msra.mxu0 0.0
        %259 = vmatprep.subr.mxu0 0.0
        %260 = vmatpush1.msra.mxu0 0.0
        %261 = vmatprep.subr.mxu0 0.0
        %262 = vmatpush1.msra.mxu0 0.0
        %263 = vmatprep.subr.mxu0 0.0
        %264 = vmatpush1.msra.mxu0 0.0
        %265 = vmatprep.subr.mxu0 0.0
        %266 = vmatpush1.msra.mxu0 0.0
        %267 = vmatprep.subr.mxu0 0.0
        %268 = vmatpush1.msra.mxu0 0.0
        %269 = vmatprep.subr.mxu0 0.0
        %270 = vmatpush1.msra.mxu0 0.0
        %271 = vmatprep.subr.mxu0 0.0
        %272 = vmatpush1.msra.mxu0 0.0
        %273 = vmatprep.subr.mxu0 0.0
        %274 = vmatpush1.msra.mxu0 0.0
        %275 = vmatprep.subr.mxu0 0.0
        %276 = vmatpush1.msra.mxu0 0.0
        %277 = vmatprep.subr.mxu0 0.0
        %278 = vmatpush1.msra.mxu0 0.0
        %279 = vmatprep.subr.mxu0 0.0
        %280 = vmatpush1.msra.mxu0 0.0
        %281 = vmatprep.subr.mxu0 0.0
        %282 = vmatpush1.msra.mxu0 0.0
        %283 = vmatprep.subr.mxu0 0.0
        %284 = vmatpush1.msra.mxu0 0.0
        %285 = vmatprep.subr.mxu0 0.0
        %286 = vmatpush1.msra.mxu0 0.0
        %287 = vmatprep.subr.mxu0 0.0
        %288 = vmatpush1.msra.mxu0 0.0
        %289 = vmatprep.subr.mxu0 0.0
        %290 = vmatpush1.msra.mxu0 0.0
        %291 = vmatprep.subr.mxu0 0.0
        %292 = vmatpush1.msra.mxu0 0.0
        %293 = vmatprep.subr.mxu0 0.0
        %294 = vmatpush1.msra.mxu0 0.0
        %295 = vmatprep.subr.mxu0 0.0
        %296 = vmatpush1.msra.mxu0 0.0
        %297 = vmatprep.subr.mxu0 0.0
        %298 = vmatpush1.msra.mxu0 0.0
        %299 = vmatprep.mubr.f32.mxu0 0.0
        %v300 = vand.u32 %v232, 4294901760
        %v301 = vsub.f32 %v232, %v300
        %v302 = vand.u32 %v301, 4294901760
        %v303 = vsub.f32 %v301, %v302
        %v304 = vand.u32 %v303, 4294901760
        %305 = vmatmul.mubr.f32.gmra.mrb[0].mxu0 %v304
        %v306 = vpop.f32.mrb[0].mxu0
        %v307 = vadd.f32 0.0, %v306
        %v308 = vpop.f32.mrb[0].mxu0
        %309 = vdwg.mxu0
        %310 = vmatprep.subr.mxu0 0.0
        %v311 = vand.u32 %v229, 4294901760
        %v312 = vsub.f32 %v229, %v311
        %v313 = vand.u32 %v312, 4294901760
        %v314 = vsub.f32 %v312, %v313
        %v315 = vand.u32 %v314, 4294901760
        %316 = vmatpush1.msra.mxu0 %v315
        %317 = vmatprep.subr.mxu0 0.0
        %318 = vmatpush1.msra.mxu0 0.0
        %319 = vmatprep.subr.mxu0 0.0
        %320 = vmatpush1.msra.mxu0 0.0
        %321 = vmatprep.subr.mxu0 0.0
        %322 = vmatpush1.msra.mxu0 0.0
        %323 = vmatprep.subr.mxu0 0.0
        %324 = vmatpush1.msra.mxu0 0.0
        %325 = vmatprep.subr.mxu0 0.0
        %326 = vmatpush1.msra.mxu0 0.0
        %327 = vmatprep.subr.mxu0 0.0
        %328 = vmatpush1.msra.mxu0 0.0
        %329 = vmatprep.subr.mxu0 0.0
        %330 = vmatpush1.msra.mxu0 0.0
        %331 = vmatprep.subr.mxu0 0.0
        %332 = vmatpush1.msra.mxu0 0.0
        %333 = vmatprep.subr.mxu0 0.0
        %334 = vmatpush1.msra.mxu0 0.0
        %335 = vmatprep.subr.mxu0 0.0
        %336 = vmatpush1.msra.mxu0 0.0
        %337 = vmatprep.subr.mxu0 0.0
        %338 = vmatpush1.msra.mxu0 0.0
        %339 = vmatprep.subr.mxu0 0.0
        %340 = vmatpush1.msra.mxu0 0.0
        %341 = vmatprep.subr.mxu0 0.0
        %342 = vmatpush1.msra.mxu0 0.0
        %343 = vmatprep.subr.mxu0 0.0
        %344 = vmatpush1.msra.mxu0 0.0
        %345 = vmatprep.subr.mxu0 0.0
        %346 = vmatpush1.msra.mxu0 0.0
        %347 = vmatprep.subr.mxu0 0.0
        %348 = vmatpush1.msra.mxu0 0.0
        %349 = vmatprep.subr.mxu0 0.0
        %350 = vmatpush1.msra.mxu0 0.0
        %351 = vmatprep.subr.mxu0 0.0
        %352 = vmatpush1.msra.mxu0 0.0
        %353 = vmatprep.subr.mxu0 0.0
        %354 = vmatpush1.msra.mxu0 0.0
        %355 = vmatprep.subr.mxu0 0.0
        %356 = vmatpush1.msra.mxu0 0.0
        %357 = vmatprep.subr.mxu0 0.0
        %358 = vmatpush1.msra.mxu0 0.0
        %359 = vmatprep.subr.mxu0 0.0
        %360 = vmatpush1.msra.mxu0 0.0
        %361 = vmatprep.subr.mxu0 0.0
        %362 = vmatpush1.msra.mxu0 0.0
        %363 = vmatprep.subr.mxu0 0.0
        %364 = vmatpush1.msra.mxu0 0.0
        %365 = vmatprep.subr.mxu0 0.0
        %366 = vmatpush1.msra.mxu0 0.0
        %367 = vmatprep.subr.mxu0 0.0
        %368 = vmatpush1.msra.mxu0 0.0
        %369 = vmatprep.subr.mxu0 0.0
        %370 = vmatpush1.msra.mxu0 0.0
        %371 = vmatprep.subr.mxu0 0.0
        %372 = vmatpush1.msra.mxu0 0.0
        %373 = vmatprep.subr.mxu0 0.0
        %374 = vmatpush1.msra.mxu0 0.0
        %375 = vmatprep.subr.mxu0 0.0
        %376 = vmatpush1.msra.mxu0 0.0
        %377 = vmatprep.subr.mxu0 0.0
        %378 = vmatpush1.msra.mxu0 0.0
        %379 = vmatprep.mubr.f32.mxu0 0.0
        %v380 = vand.u32 %v232, 4294901760
        %381 = vmatmul.mubr.f32.gmra.mrb[0].mxu0 %v380
        %v382 = vpop.f32.mrb[0].mxu0
        %v383 = vadd.f32 %v307, %v382
        %v384 = vpop.f32.mrb[0].mxu0
        %385 = vdwg.mxu0
        %386 = vmatprep.subr.mxu0 0.0
        %v387 = vand.u32 %v229, 4294901760
        %v388 = vsub.f32 %v229, %v387
        %389 = vmatpush1.msra.mxu0 %v388
        %390 = vmatprep.subr.mxu0 0.0
        %391 = vmatpush1.msra.mxu0 0.0
        %392 = vmatprep.subr.mxu0 0.0
        %393 = vmatpush1.msra.mxu0 0.0
        %394 = vmatprep.subr.mxu0 0.0
        %395 = vmatpush1.msra.mxu0 0.0
        %396 = vmatprep.subr.mxu0 0.0
        %397 = vmatpush1.msra.mxu0 0.0
        %398 = vmatprep.subr.mxu0 0.0
        %399 = vmatpush1.msra.mxu0 0.0
        %400 = vmatprep.subr.mxu0 0.0
        %401 = vmatpush1.msra.mxu0 0.0
        %402 = vmatprep.subr.mxu0 0.0
        %403 = vmatpush1.msra.mxu0 0.0
        %404 = vmatprep.subr.mxu0 0.0
        %405 = vmatpush1.msra.mxu0 0.0
        %406 = vmatprep.subr.mxu0 0.0
        %407 = vmatpush1.msra.mxu0 0.0
        %408 = vmatprep.subr.mxu0 0.0
        %409 = vmatpush1.msra.mxu0 0.0
        %410 = vmatprep.subr.mxu0 0.0
        %411 = vmatpush1.msra.mxu0 0.0
        %412 = vmatprep.subr.mxu0 0.0
        %413 = vmatpush1.msra.mxu0 0.0
        %414 = vmatprep.subr.mxu0 0.0
        %415 = vmatpush1.msra.mxu0 0.0
        %416 = vmatprep.subr.mxu0 0.0
        %417 = vmatpush1.msra.mxu0 0.0
        %418 = vmatprep.subr.mxu0 0.0
        %419 = vmatpush1.msra.mxu0 0.0
        %420 = vmatprep.subr.mxu0 0.0
        %421 = vmatpush1.msra.mxu0 0.0
        %422 = vmatprep.subr.mxu0 0.0
        %423 = vmatpush1.msra.mxu0 0.0
        %424 = vmatprep.subr.mxu0 0.0
        %425 = vmatpush1.msra.mxu0 0.0
        %426 = vmatprep.subr.mxu0 0.0
        %427 = vmatpush1.msra.mxu0 0.0
        %428 = vmatprep.subr.mxu0 0.0
        %429 = vmatpush1.msra.mxu0 0.0
        %430 = vmatprep.subr.mxu0 0.0
        %431 = vmatpush1.msra.mxu0 0.0
        %432 = vmatprep.subr.mxu0 0.0
        %433 = vmatpush1.msra.mxu0 0.0
        %434 = vmatprep.subr.mxu0 0.0
        %435 = vmatpush1.msra.mxu0 0.0
        %436 = vmatprep.subr.mxu0 0.0
        %437 = vmatpush1.msra.mxu0 0.0
        %438 = vmatprep.subr.mxu0 0.0
        %439 = vmatpush1.msra.mxu0 0.0
        %440 = vmatprep.subr.mxu0 0.0
        %441 = vmatpush1.msra.mxu0 0.0
        %442 = vmatprep.subr.mxu0 0.0
        %443 = vmatpush1.msra.mxu0 0.0
        %444 = vmatprep.subr.mxu0 0.0
        %445 = vmatpush1.msra.mxu0 0.0
        %446 = vmatprep.subr.mxu0 0.0
        %447 = vmatpush1.msra.mxu0 0.0
        %448 = vmatprep.subr.mxu0 0.0
        %449 = vmatpush1.msra.mxu0 0.0
        %450 = vmatprep.subr.mxu0 0.0
        %451 = vmatpush1.msra.mxu0 0.0
        %452 = vmatprep.mubr.f32.mxu0 0.0
        %v453 = vand.u32 %v232, 4294901760
        %v454 = vsub.f32 %v232, %v453
        %455 = vmatmul.mubr.f32.gmra.mrb[0].mxu0 %v454
        %v456 = vpop.f32.mrb[0].mxu0
        %v457 = vadd.f32 %v383, %v456
        %v458 = vpop.f32.mrb[0].mxu0
        %459 = vdwg.mxu0
        %460 = vmatprep.subr.mxu0 0.0
        %v461 = vand.u32 %v229, 4294901760
        %462 = vmatpush1.msra.mxu0 %v461
        %463 = vmatprep.subr.mxu0 0.0
        %464 = vmatpush1.msra.mxu0 0.0
        %465 = vmatprep.subr.mxu0 0.0
        %466 = vmatpush1.msra.mxu0 0.0
        %467 = vmatprep.subr.mxu0 0.0
        %468 = vmatpush1.msra.mxu0 0.0
        %469 = vmatprep.subr.mxu0 0.0
        %470 = vmatpush1.msra.mxu0 0.0
        %471 = vmatprep.subr.mxu0 0.0
        %472 = vmatpush1.msra.mxu0 0.0
        %473 = vmatprep.subr.mxu0 0.0
        %474 = vmatpush1.msra.mxu0 0.0
        %475 = vmatprep.subr.mxu0 0.0
        %476 = vmatpush1.msra.mxu0 0.0
        %477 = vmatprep.subr.mxu0 0.0
        %478 = vmatpush1.msra.mxu0 0.0
        %479 = vmatprep.subr.mxu0 0.0
        %480 = vmatpush1.msra.mxu0 0.0
        %481 = vmatprep.subr.mxu0 0.0
        %482 = vmatpush1.msra.mxu0 0.0
        %483 = vmatprep.subr.mxu0 0.0
        %484 = vmatpush1.msra.mxu0 0.0
        %485 = vmatprep.subr.mxu0 0.0
        %486 = vmatpush1.msra.mxu0 0.0
        %487 = vmatprep.subr.mxu0 0.0
        %488 = vmatpush1.msra.mxu0 0.0
        %489 = vmatprep.subr.mxu0 0.0
        %490 = vmatpush1.msra.mxu0 0.0
        %491 = vmatprep.subr.mxu0 0.0
        %492 = vmatpush1.msra.mxu0 0.0
        %493 = vmatprep.subr.mxu0 0.0
        %494 = vmatpush1.msra.mxu0 0.0
        %495 = vmatprep.subr.mxu0 0.0
        %496 = vmatpush1.msra.mxu0 0.0
        %497 = vmatprep.subr.mxu0 0.0
        %498 = vmatpush1.msra.mxu0 0.0
        %499 = vmatprep.subr.mxu0 0.0
        %500 = vmatpush1.msra.mxu0 0.0
        %501 = vmatprep.subr.mxu0 0.0
        %502 = vmatpush1.msra.mxu0 0.0
        %503 = vmatprep.subr.mxu0 0.0
        %504 = vmatpush1.msra.mxu0 0.0
        %505 = vmatprep.subr.mxu0 0.0
        %506 = vmatpush1.msra.mxu0 0.0
        %507 = vmatprep.subr.mxu0 0.0
        %508 = vmatpush1.msra.mxu0 0.0
        %509 = vmatprep.subr.mxu0 0.0
        %510 = vmatpush1.msra.mxu0 0.0
        %511 = vmatprep.subr.mxu0 0.0
        %512 = vmatpush1.msra.mxu0 0.0
        %513 = vmatprep.subr.mxu0 0.0
        %514 = vmatpush1.msra.mxu0 0.0
        %515 = vmatprep.subr.mxu0 0.0
        %516 = vmatpush1.msra.mxu0 0.0
        %517 = vmatprep.subr.mxu0 0.0
        %518 = vmatpush1.msra.mxu0 0.0
        %519 = vmatprep.subr.mxu0 0.0
        %520 = vmatpush1.msra.mxu0 0.0
        %521 = vmatprep.subr.mxu0 0.0
        %522 = vmatpush1.msra.mxu0 0.0
        %523 = vmatprep.subr.mxu0 0.0
        %524 = vmatpush1.msra.mxu0 0.0
        %525 = vmatprep.mubr.f32.mxu0 0.0
        %v526 = vand.u32 %v232, 4294901760
        %v527 = vsub.f32 %v232, %v526
        %v528 = vand.u32 %v527, 4294901760
        %529 = vmatmul.mubr.f32.gmra.mrb[0].mxu0 %v528
        %v530 = vpop.f32.mrb[0].mxu0
        %v531 = vadd.f32 %v457, %v530
        %v532 = vpop.f32.mrb[0].mxu0
        %533 = vdwg.mxu0
        %534 = vmatprep.subr.mxu0 0.0
        %v535 = vand.u32 %v229, 4294901760
        %v536 = vsub.f32 %v229, %v535
        %v537 = vand.u32 %v536, 4294901760
        %538 = vmatpush1.msra.mxu0 %v537
        %539 = vmatprep.subr.mxu0 0.0
        %540 = vmatpush1.msra.mxu0 0.0
        %541 = vmatprep.subr.mxu0 0.0
        %542 = vmatpush1.msra.mxu0 0.0
        %543 = vmatprep.subr.mxu0 0.0
        %544 = vmatpush1.msra.mxu0 0.0
        %545 = vmatprep.subr.mxu0 0.0
        %546 = vmatpush1.msra.mxu0 0.0
        %547 = vmatprep.subr.mxu0 0.0
        %548 = vmatpush1.msra.mxu0 0.0
        %549 = vmatprep.subr.mxu0 0.0
        %550 = vmatpush1.msra.mxu0 0.0
        %551 = vmatprep.subr.mxu0 0.0
        %552 = vmatpush1.msra.mxu0 0.0
        %553 = vmatprep.subr.mxu0 0.0
        %554 = vmatpush1.msra.mxu0 0.0
        %555 = vmatprep.subr.mxu0 0.0
        %556 = vmatpush1.msra.mxu0 0.0
        %557 = vmatprep.subr.mxu0 0.0
        %558 = vmatpush1.msra.mxu0 0.0
        %559 = vmatprep.subr.mxu0 0.0
        %560 = vmatpush1.msra.mxu0 0.0
        %561 = vmatprep.subr.mxu0 0.0
        %562 = vmatpush1.msra.mxu0 0.0
        %563 = vmatprep.subr.mxu0 0.0
        %564 = vmatpush1.msra.mxu0 0.0
        %565 = vmatprep.subr.mxu0 0.0
        %566 = vmatpush1.msra.mxu0 0.0
        %567 = vmatprep.subr.mxu0 0.0
        %568 = vmatpush1.msra.mxu0 0.0
        %569 = vmatprep.subr.mxu0 0.0
        %570 = vmatpush1.msra.mxu0 0.0
        %571 = vmatprep.subr.mxu0 0.0
        %572 = vmatpush1.msra.mxu0 0.0
        %573 = vmatprep.subr.mxu0 0.0
        %574 = vmatpush1.msra.mxu0 0.0
        %575 = vmatprep.subr.mxu0 0.0
        %576 = vmatpush1.msra.mxu0 0.0
        %577 = vmatprep.subr.mxu0 0.0
        %578 = vmatpush1.msra.mxu0 0.0
        %579 = vmatprep.subr.mxu0 0.0
        %580 = vmatpush1.msra.mxu0 0.0
        %581 = vmatprep.subr.mxu0 0.0
        %582 = vmatpush1.msra.mxu0 0.0
        %583 = vmatprep.subr.mxu0 0.0
        %584 = vmatpush1.msra.mxu0 0.0
        %585 = vmatprep.subr.mxu0 0.0
        %586 = vmatpush1.msra.mxu0 0.0
        %587 = vmatprep.subr.mxu0 0.0
        %588 = vmatpush1.msra.mxu0 0.0
        %589 = vmatprep.subr.mxu0 0.0
        %590 = vmatpush1.msra.mxu0 0.0
        %591 = vmatprep.subr.mxu0 0.0
        %592 = vmatpush1.msra.mxu0 0.0
        %593 = vmatprep.subr.mxu0 0.0
        %594 = vmatpush1.msra.mxu0 0.0
        %595 = vmatprep.subr.mxu0 0.0
        %596 = vmatpush1.msra.mxu0 0.0
        %597 = vmatprep.subr.mxu0 0.0
        %598 = vmatpush1.msra.mxu0 0.0
        %599 = vmatprep.subr.mxu0 0.0
        %600 = vmatpush1.msra.mxu0 0.0
        %601 = vmatprep.mubr.f32.mxu0 0.0
        %v602 = vand.u32 %v232, 4294901760
        %603 = vmatmul.mubr.f32.gmra.mrb[0].mxu0 %v602
        %v604 = vpop.f32.mrb[0].mxu0
        %v605 = vadd.f32 %v531, %v604
        %v606 = vpop.f32.mrb[0].mxu0
        %607 = vdwg.mxu0
        %608 = vmatprep.subr.mxu0 0.0
        %v609 = vand.u32 %v229, 4294901760
        %610 = vmatpush1.msra.mxu0 %v609
        %611 = vmatprep.subr.mxu0 0.0
        %612 = vmatpush1.msra.mxu0 0.0
        %613 = vmatprep.subr.mxu0 0.0
        %614 = vmatpush1.msra.mxu0 0.0
        %615 = vmatprep.subr.mxu0 0.0
        %616 = vmatpush1.msra.mxu0 0.0
        %617 = vmatprep.subr.mxu0 0.0
        %618 = vmatpush1.msra.mxu0 0.0
        %619 = vmatprep.subr.mxu0 0.0
        %620 = vmatpush1.msra.mxu0 0.0
        %621 = vmatprep.subr.mxu0 0.0
        %622 = vmatpush1.msra.mxu0 0.0
        %623 = vmatprep.subr.mxu0 0.0
        %624 = vmatpush1.msra.mxu0 0.0
        %625 = vmatprep.subr.mxu0 0.0
        %626 = vmatpush1.msra.mxu0 0.0
        %627 = vmatprep.subr.mxu0 0.0
        %628 = vmatpush1.msra.mxu0 0.0
        %629 = vmatprep.subr.mxu0 0.0
        %630 = vmatpush1.msra.mxu0 0.0
        %631 = vmatprep.subr.mxu0 0.0
        %632 = vmatpush1.msra.mxu0 0.0
        %633 = vmatprep.subr.mxu0 0.0
        %634 = vmatpush1.msra.mxu0 0.0
        %635 = vmatprep.subr.mxu0 0.0
        %636 = vmatpush1.msra.mxu0 0.0
        %637 = vmatprep.subr.mxu0 0.0
        %638 = vmatpush1.msra.mxu0 0.0
        %639 = vmatprep.subr.mxu0 0.0
        %640 = vmatpush1.msra.mxu0 0.0
        %641 = vmatprep.subr.mxu0 0.0
        %642 = vmatpush1.msra.mxu0 0.0
        %643 = vmatprep.subr.mxu0 0.0
        %644 = vmatpush1.msra.mxu0 0.0
        %645 = vmatprep.subr.mxu0 0.0
        %646 = vmatpush1.msra.mxu0 0.0
        %647 = vmatprep.subr.mxu0 0.0
        %648 = vmatpush1.msra.mxu0 0.0
        %649 = vmatprep.subr.mxu0 0.0
        %650 = vmatpush1.msra.mxu0 0.0
        %651 = vmatprep.subr.mxu0 0.0
        %652 = vmatpush1.msra.mxu0 0.0
        %653 = vmatprep.subr.mxu0 0.0
        %654 = vmatpush1.msra.mxu0 0.0
        %655 = vmatprep.subr.mxu0 0.0
        %656 = vmatpush1.msra.mxu0 0.0
        %657 = vmatprep.subr.mxu0 0.0
        %658 = vmatpush1.msra.mxu0 0.0
        %659 = vmatprep.subr.mxu0 0.0
        %660 = vmatpush1.msra.mxu0 0.0
        %661 = vmatprep.subr.mxu0 0.0
        %662 = vmatpush1.msra.mxu0 0.0
        %663 = vmatprep.subr.mxu0 0.0
        %664 = vmatpush1.msra.mxu0 0.0
        %665 = vmatprep.subr.mxu0 0.0
        %666 = vmatpush1.msra.mxu0 0.0
        %667 = vmatprep.subr.mxu0 0.0
        %668 = vmatpush1.msra.mxu0 0.0
        %669 = vmatprep.subr.mxu0 0.0
        %670 = vmatpush1.msra.mxu0 0.0
        %671 = vmatprep.subr.mxu0 0.0
        %672 = vmatpush1.msra.mxu0 0.0
        %673 = vmatprep.mubr.f32.mxu0 0.0
        %v674 = vand.u32 %v232, 4294901760
        %675 = vmatmul.mubr.f32.gmra.mrb[0].mxu0 %v674
        %v676 = vpop.f32.mrb[0].mxu0
        %v677 = vadd.f32 %v605, %v676
        %v678 = vpop.f32.mrb[0].mxu0
        %679 = vdwg.mxu0
        %v680 = vld [vmem:[%s218] sm:$0x1]
        %v681 = vadd.f32 %v680, %v677
        %vm682 = vcmask 253952
        %683 = vst.msk [vmem:[%s218] sm:$0x1] %vm682, %v681
        %s684 = sand.u32 %s107, 1
        %s685 = scalar_lea.sflag [#allocation4], %s684
        %s686 = sand.u32 %s107, 1
        %s687 = scalar_lea.vmem [#allocation7], %s686
        // Predicated region
        $region41: #{tpu_custom_call.1} parent=27 // pred_check
          %p688 = pneg %p117
        $region42: #{tpu_custom_call.1} parent=27 // pred_check_branch
          %690 = sbr.rel (%p688) target = $region44
        $region43: #{tpu_custom_call.1} parent=27 // pred_region
          %s692 = ssub.s32 16, 16
          %693 = vsyncadd %s685, %s692
          %s694 = smul.addr %s27, 2
          %s695 = sadd.s32 %s28, %s694
          %s696 = smul.addr %s695, 16
          %s697 = scalar_lea.hbm %s2, %s696
          %s699 = sshll.u32 %s687, 4
          %s700 = int_to_ptr.vmem [resolvable:$true] %s699
          %702 = dma.vmem_to_hbm [thread:$0]  %s700, 16, %s697, %s685
        $region44: #{tpu_custom_call.1} parent=27 // pred_fallthru
          _
      $region28: #{tpu_custom_call.1} parent=5 // pred_fallthru
        _
      %p703 = scmp.le.s32.totalorder 2, %s17
      // Predicated region
      $region45: #{tpu_custom_call.1} parent=5 // pred_check
        %p704 = pneg %p703
      $region46: #{tpu_custom_call.1} parent=5 // pred_check_branch
        %706 = sbr.rel (%p704) target = $region48
      $region47: #{tpu_custom_call.1} parent=5 // pred_region
        %s707 = ssub.s32 %s17, 2
        // Predicated region
        $region49: #{tpu_custom_call.1} parent=47 // pred_check
          %p708 = pneg %p123
        $region50: #{tpu_custom_call.1} parent=47 // pred_check_branch
          %710 = sbr.rel (%p708) target = $region52
        $region51: #{tpu_custom_call.1} parent=47 // pred_region
          %s711 = sand.u32 %s108, 1
          %s712 = scalar_lea.sflag [#allocation4], %s711
          %s713 = sand.u32 %s108, 1
          %s714 = scalar_lea.vmem [#allocation7], %s713
          %715 = dma.done %s712, 16
        $region52: #{tpu_custom_call.1} parent=47 // pred_fallthru
          _
      $region48: #{tpu_custom_call.1} parent=5 // pred_fallthru
        _
    $region6: #{tpu_custom_call.1} parent=1 // loop_footer
      %s21 = sadd.s32 1, %s17
    $region7: #{tpu_custom_call.1} parent=1 // loop_footer_branch
      %16 = sbr.rel target = $region3
    $region8: #{tpu_custom_call.1} parent=1 // loop_exit
      _
    %716 = vsyncpa [#allocation3], 1
    %s717 = scalar_lea.sflag [#allocation3], 1
    %718 = vsyncpa %s717, 1
    %719 = vsyncpa [#allocation6], 1
    %s720 = scalar_lea.sflag [#allocation6], 1
    %721 = vsyncpa %s720, 1
    %722 = vsyncpa [#allocation4], 1
    %s723 = scalar_lea.sflag [#allocation4], 1
    %724 = vsyncpa %s723, 1

</llo_original>
